<compile_context>
chip_gen: v7x
topology: tpu7x:2x2x1
jax: 0.10.0
libtpu: 0.0.40
codegen_flags: <defaults>
</compile_context>

<pallas_src>
import math

import jax
import jax.numpy as jnp
from jax import lax
from jax.experimental import pallas as pl
from jax.experimental.pallas import tpu as pltpu


LN_EPS = 1e-12  # BertLayerNorm default eps


def _digcn_fused_kernel(h_ref, adj_ref, w_ref, b_ref, gamma_ref, beta_ref,
                        out_ref, h_carry):
    """One (batch b, layer l) grid step of the fused DiGCNModuleAtt forward."""
    l = pl.program_id(1)
    n_layers = pl.num_programs(1)

    # Load the input hidden state into the VMEM carry only at the first layer.
    @pl.when(l == 0)
    def _():
        h_carry[...] = h_ref[0].astype(jnp.float32)

    h = h_carry[...]                          # [S, D] f32 (previous layer output)
    adj = adj_ref[0].astype(jnp.float32)      # [S, S] f32
    S, D = h.shape
    inv_temper = 1.0 / math.sqrt(float(D))

    h_bf = h.astype(jnp.bfloat16)

    # ---- get_att: scaled dot-product attention masked by adjacency ----
    u = lax.dot_general(h_bf, h_bf, (((1,), (1,)), ((), ())),
                        preferred_element_type=jnp.float32) * inv_temper   # [S,S]
    u_max = jnp.max(u, axis=-1, keepdims=True)
    e = jnp.exp(u - u_max)
    attn_scores = e * pl.reciprocal(jnp.sum(e, axis=-1, keepdims=True),
                                    approx=True)            # softmax(dim=-1)
    delta = attn_scores * adj
    att = delta * pl.reciprocal(jnp.sum(delta, axis=-1, keepdims=True) + 1e-10,
                                approx=True)                 # [S, S] f32

    # ---- fused left|self|right projections: one (D, 3D) matmul ----
    proj = jnp.dot(h_bf, w_ref[0], preferred_element_type=jnp.float32) + b_ref[0]
    h_left = proj[:, :D]
    h_self = proj[:, D:2 * D]
    h_right = proj[:, 2 * D:]

    # ---- triangular splits of the attention matrix ----
    row = lax.broadcasted_iota(jnp.int32, (S, S), 0)
    col = lax.broadcasted_iota(jnp.int32, (S, S), 1)
    a_left = jnp.where(col > row, att, 0.0).astype(jnp.bfloat16)    # triu, diag=1
    a_right = jnp.where(col < row, att, 0.0).astype(jnp.bfloat16)   # strict lower
    diag_att = jnp.sum(jnp.where(col == row, att, 0.0),
                       axis=-1, keepdims=True)                      # [S, 1] f32

    ctx = (jnp.dot(a_left, h_left.astype(jnp.bfloat16),
                   preferred_element_type=jnp.float32)
           + jnp.dot(a_right, h_right.astype(jnp.bfloat16),
                     preferred_element_type=jnp.float32)
           + diag_att * h_self)                                     # [S, D] f32

    # ---- BertLayerNorm over hidden dim + ReLU ----
    mean = jnp.mean(ctx, axis=-1, keepdims=True)
    var = jnp.mean((ctx - mean) ** 2, axis=-1, keepdims=True)
    normed = (ctx - mean) * lax.rsqrt(var + LN_EPS)
    o = normed * gamma_ref[0] + beta_ref[0]
    new_h = jnp.maximum(o, 0.0)

    h_carry[...] = new_h

    @pl.when(l == n_layers - 1)
    def _():
        out_ref[0] = new_h.astype(out_ref.dtype)


def digcn_module_att(hidden_state, adjacency_matrix, stacked_params):
    """DiGCNModuleAtt.forward (output_attention=False, output_all_layers=False).

    hidden_state: [B, S, D]; adjacency_matrix: [B, S, S].
    stacked_params: (w_all [L,D,3D] bf16, b_all [L,1,3D], gamma_all [L,1,D],
                     beta_all [L,1,D]).
    """
    # TODO(synk): output_all_layers=True / output_attention=True return paths are
    # not implemented in the fused kernel (default module config returns last layer).
    w_all, b_all, gamma_all, beta_all = stacked_params
    B, S, D = hidden_state.shape
    L = w_all.shape[0]

    # Rough per-step VMEM budget (double-buffered blocks + carry + temporaries).
    blk_bytes = (S * D * 4              # hidden block
                 + S * S * 4            # adjacency block
                 + D * 3 * D * 2        # fused bf16 weights
                 + 3 * D * 4 + 2 * D * 4  # bias, gamma, beta
                 + S * D * 4)           # output block
    tmp_bytes = 5 * S * S * 4 + 6 * S * D * 4 + S * 3 * D * 4
    vmem_limit = int(min(max(2 * blk_bytes + S * D * 4 + tmp_bytes,
                             32 * 1024 * 1024),
                         64 * 1024 * 1024))

    return pl.pallas_call(
        _digcn_fused_kernel,
        out_shape=jax.ShapeDtypeStruct((B, S, D), hidden_state.dtype),
        grid_spec=pltpu.PrefetchScalarGridSpec(
            num_scalar_prefetch=0,
            grid=(B, L),
            in_specs=[
                pl.BlockSpec((1, S, D), lambda b, l: (b, 0, 0)),       # hidden_state
                pl.BlockSpec((1, S, S), lambda b, l: (b, 0, 0)),       # adjacency
                pl.BlockSpec((1, D, 3 * D), lambda b, l: (l, 0, 0)),   # fused weights
                pl.BlockSpec((1, 1, 3 * D), lambda b, l: (l, 0, 0)),   # fused bias
                pl.BlockSpec((1, 1, D), lambda b, l: (l, 0, 0)),       # LN gamma
                pl.BlockSpec((1, 1, D), lambda b, l: (l, 0, 0)),       # LN beta
            ],
            out_specs=pl.BlockSpec((1, S, D), lambda b, l: (b, 0, 0)),
            scratch_shapes=[pltpu.VMEM((S, D), jnp.float32)],          # layer carry
        ),
        compiler_params=pltpu.CompilerParams(
            dimension_semantics=("parallel", "arbitrary"),
            vmem_limit_bytes=vmem_limit),
    )(hidden_state, adjacency_matrix, w_all, b_all, gamma_all, beta_all)


def init_module_params(key, layer_number, hidden_size):
    """Deterministic init matching DiGCNLayerAtt.__init__ (xavier_normal_ weights,
    uniform(-1/sqrt(fan_in), 1/sqrt(fan_in)) biases, LayerNorm gamma=1 / beta=0).
    The unused `self.linear` of the PyTorch module is omitted (never used in forward).
    The three projection weights are pre-transposed and concatenated into one
    (D, 3D) bf16 matrix per layer (left | self | right)."""
    D = hidden_size
    std = math.sqrt(2.0 / (D + D))   # xavier_normal_ std for square weights
    bound = 1.0 / math.sqrt(D)       # bias bound (fan_in = D)

    def w(kk):
        # PyTorch Linear weight is (out, in); pre-transpose so kernel does x @ W_t.
        return (std * jax.random.normal(kk, (D, D), dtype=jnp.float32)).T

    def b(kk):
        return jax.random.uniform(kk, (1, D), dtype=jnp.float32,
                                  minval=-bound, maxval=bound)

    w_list, b_list = [], []
    for k in jax.random.split(key, layer_number):
        ks = jax.random.split(k, 6)
        wl_t, bl = w(ks[0]), b(ks[1])
        ws_t, bs = w(ks[2]), b(ks[3])
        wr_t, br = w(ks[4]), b(ks[5])
        w_list.append(jnp.concatenate([wl_t, ws_t, wr_t], axis=1))   # [D, 3D]
        b_list.append(jnp.concatenate([bl, bs, br], axis=1))          # [1, 3D]

    w_all = jnp.stack(w_list).astype(jnp.bfloat16)                    # [L, D, 3D]
    b_all = jnp.stack(b_list)                                         # [L, 1, 3D]
    gamma_all = jnp.ones((layer_number, 1, D), dtype=jnp.float32)
    beta_all = jnp.zeros((layer_number, 1, D), dtype=jnp.float32)
    return (w_all, b_all, gamma_all, beta_all)


if __name__ == "__main__":
    B, S, D = 2, 8, 32
    layer_number = 2

    key = jax.random.PRNGKey(0)
    k_h, k_adj, k_params = jax.random.split(key, 3)

    hidden_state = jax.random.normal(k_h, (B, S, D), dtype=jnp.float32)
    adjacency_matrix = (jax.random.uniform(k_adj, (B, S, S)) < 0.5).astype(jnp.float32)

    params = init_module_params(k_params, layer_number, D)

    out = digcn_module_att(hidden_state, adjacency_matrix, params)
    out = jax.block_until_ready(out)

    assert out.shape == (B, S, D)
    assert bool(jnp.all(jnp.isfinite(out)))
    print("KERNEL_OK")
</pallas_src>

<mosaic_0001>
module attributes {stable_mosaic.version = 11 : i64} {
  func.func @_digcn_fused_kernel(%arg0: i32, %arg1: i32, %arg2: memref<1x8x32xf32, #tpu.memory_space<vmem>>, %arg3: memref<1x8x8xf32, #tpu.memory_space<vmem>>, %arg4: memref<1x32x96xbf16, #tpu.memory_space<vmem>>, %arg5: memref<1x1x96xf32, #tpu.memory_space<vmem>>, %arg6: memref<1x1x32xf32, #tpu.memory_space<vmem>>, %arg7: memref<1x1x32xf32, #tpu.memory_space<vmem>>, %arg8: memref<1x8x32xf32, #tpu.memory_space<vmem>>, %arg9: memref<8x32xf32, #tpu.memory_space<vmem>>) attributes {dimension_semantics = [#tpu.dimension_semantics<parallel>, #tpu.dimension_semantics<arbitrary>], iteration_bounds = array<i64: 2, 2>, scalar_prefetch = 0 : i64, scratch_operands = 1 : i64, tpu.core_type = #tpu.core_type<tc>, window_params = [{transform_indices = @transform_0, window_bounds = array<i64: 1, 8, 32>}, {transform_indices = @transform_1, window_bounds = array<i64: 1, 8, 8>}, {transform_indices = @transform_2, window_bounds = array<i64: 1, 32, 96>}, {transform_indices = @transform_3, window_bounds = array<i64: 1, 1, 96>}, {transform_indices = @transform_4, window_bounds = array<i64: 1, 1, 32>}, {transform_indices = @transform_5, window_bounds = array<i64: 1, 1, 32>}, {transform_indices = @transform_6, window_bounds = array<i64: 1, 8, 32>}]} {
    %c0_i32 = arith.constant 0 : i32
    %0 = arith.cmpi eq, %arg1, %c0_i32 : i32
    %1 = arith.extui %0 : i1 to i32
    %c0_i32_0 = arith.constant 0 : i32
    %2 = arith.cmpi ne, %1, %c0_i32_0 : i32
    scf.if %2 {
      %c0_38 = arith.constant 0 : index
      %c0_39 = arith.constant 0 : index
      %c0_40 = arith.constant 0 : index
      %93 = vector.load %arg2[%c0_38, %c0_39, %c0_40] : memref<1x8x32xf32, #tpu.memory_space<vmem>>, vector<1x8x32xf32>
      %94 = vector.shape_cast %93 : vector<1x8x32xf32> to vector<8x32xf32>
      %c0_41 = arith.constant 0 : index
      %c0_42 = arith.constant 0 : index
      %95 = vector.load %arg9[%c0_41, %c0_42] : memref<8x32xf32, #tpu.memory_space<vmem>>, vector<8x32xf32>
      tpu.vector_store %arg9[%c0_41, %c0_42], %94 {strides = array<i32>} : memref<8x32xf32, #tpu.memory_space<vmem>>, vector<8x32xf32>,
    } else {
    }
    %c0 = arith.constant 0 : index
    %c0_1 = arith.constant 0 : index
    %3 = vector.load %arg9[%c0, %c0_1] : memref<8x32xf32, #tpu.memory_space<vmem>>, vector<8x32xf32>
    %c0_2 = arith.constant 0 : index
    %c0_3 = arith.constant 0 : index
    %c0_4 = arith.constant 0 : index
    %4 = vector.load %arg3[%c0_2, %c0_3, %c0_4] : memref<1x8x8xf32, #tpu.memory_space<vmem>>, vector<1x8x8xf32>
    %5 = vector.shape_cast %4 : vector<1x8x8xf32> to vector<8x8xf32>
    %6 = arith.truncf %3 : vector<8x32xf32> to vector<8x32xbf16>
    %cst = arith.constant dense<0.000000e+00> : vector<8x8xf32>
    %7 = tpu.matmul %6, %6, %cst {dimension_numbers = #tpu.dot_dimension_numbers<[1], [1], [0], [0], [0, 0, 1, 0], [], []>} : vector<8x32xbf16>, vector<8x32xbf16>, vector<8x8xf32> -> vector<8x8xf32>
    %cst_5 = arith.constant 0.176776692 : f32
    %8 = vector.broadcast %cst_5 : f32 to vector<8x8xf32>
    %9 = arith.mulf %7, %8 : vector<8x8xf32>
    %cst_6 = arith.constant dense<0xFF800000> : vector<8xf32>
    %10 = vector.multi_reduction <maximumf>, %9, %cst_6 [1] : vector<8x8xf32> to vector<8xf32>
    %11 = vector.shape_cast %10 : vector<8xf32> to vector<8x1xf32>
    %12 = vector.broadcast %11 : vector<8x1xf32> to vector<8x8xf32>
    %13 = arith.subf %9, %12 : vector<8x8xf32>
    %14 = math.exp %13 : vector<8x8xf32>
    %cst_7 = arith.constant dense<0.000000e+00> : vector<8xf32>
    %15 = vector.multi_reduction <add>, %14, %cst_7 [1] : vector<8x8xf32> to vector<8xf32>
    %16 = vector.shape_cast %15 : vector<8xf32> to vector<8x1xf32>
    %17 = tpu.reciprocal %16 {approx = true} : vector<8x1xf32> -> vector<8x1xf32>
    %18 = vector.broadcast %17 : vector<8x1xf32> to vector<8x8xf32>
    %19 = arith.mulf %14, %18 : vector<8x8xf32>
    %20 = arith.mulf %19, %5 : vector<8x8xf32>
    %cst_8 = arith.constant dense<0.000000e+00> : vector<8xf32>
    %21 = vector.multi_reduction <add>, %20, %cst_8 [1] : vector<8x8xf32> to vector<8xf32>
    %22 = vector.shape_cast %21 : vector<8xf32> to vector<8x1xf32>
    %cst_9 = arith.constant 1.000000e-10 : f32
    %23 = vector.broadcast %cst_9 : f32 to vector<8x1xf32>
    %24 = arith.addf %22, %23 : vector<8x1xf32>
    %25 = tpu.reciprocal %24 {approx = true} : vector<8x1xf32> -> vector<8x1xf32>
    %26 = vector.broadcast %25 : vector<8x1xf32> to vector<8x8xf32>
    %27 = arith.mulf %20, %26 : vector<8x8xf32>
    %c0_10 = arith.constant 0 : index
    %c0_11 = arith.constant 0 : index
    %c0_12 = arith.constant 0 : index
    %28 = vector.load %arg4[%c0_10, %c0_11, %c0_12] : memref<1x32x96xbf16, #tpu.memory_space<vmem>>, vector<1x32x96xbf16>
    %29 = vector.shape_cast %28 : vector<1x32x96xbf16> to vector<32x96xbf16>
    %cst_13 = arith.constant dense<0.000000e+00> : vector<8x96xf32>
    %30 = tpu.matmul %6, %29, %cst_13 {dimension_numbers = #tpu.dot_dimension_numbers<[1], [0], [0], [1], [0, 0, 1, 1], [], []>} : vector<8x32xbf16>, vector<32x96xbf16>, vector<8x96xf32> -> vector<8x96xf32>
    %c0_14 = arith.constant 0 : index
    %c0_15 = arith.constant 0 : index
    %c0_16 = arith.constant 0 : index
    %31 = vector.load %arg5[%c0_14, %c0_15, %c0_16] : memref<1x1x96xf32, #tpu.memory_space<vmem>>, vector<1x1x96xf32>
    %32 = vector.shape_cast %31 : vector<1x1x96xf32> to vector<1x96xf32>
    %33 = vector.broadcast %32 : vector<1x96xf32> to vector<8x96xf32>
    %34 = arith.addf %30, %33 : vector<8x96xf32>
    %35 = vector.extract_strided_slice %34 {offsets = [0, 0], sizes = [8, 32], strides = [1, 1]} : vector<8x96xf32> to vector<8x32xf32>
    %36 = vector.extract_strided_slice %34 {offsets = [0, 32], sizes = [8, 32], strides = [1, 1]} : vector<8x96xf32> to vector<8x32xf32>
    %37 = vector.extract_strided_slice %34 {offsets = [0, 64], sizes = [8, 32], strides = [1, 1]} : vector<8x96xf32> to vector<8x32xf32>
    %38 = tpu.iota {dimensions = array<i32: 0>} : vector<8x8xi32>
    %39 = tpu.iota {dimensions = array<i32: 1>} : vector<8x8xi32>
    %40 = arith.cmpi sgt, %39, %38 : vector<8x8xi32>
    %cst_17 = arith.constant 0.000000e+00 : f32
    %41 = vector.broadcast %cst_17 : f32 to vector<8x8xf32>
    %42 = arith.select %40, %27, %41 : vector<8x8xi1>, vector<8x8xf32>
    %43 = arith.truncf %42 : vector<8x8xf32> to vector<8x8xbf16>
    %44 = arith.cmpi slt, %39, %38 : vector<8x8xi32>
    %cst_18 = arith.constant 0.000000e+00 : f32
    %45 = vector.broadcast %cst_18 : f32 to vector<8x8xf32>
    %46 = arith.select %44, %27, %45 : vector<8x8xi1>, vector<8x8xf32>
    %47 = arith.truncf %46 : vector<8x8xf32> to vector<8x8xbf16>
    %48 = arith.cmpi eq, %39, %38 : vector<8x8xi32>
    %cst_19 = arith.constant 0.000000e+00 : f32
    %49 = vector.broadcast %cst_19 : f32 to vector<8x8xf32>
    %50 = arith.select %48, %27, %49 : vector<8x8xi1>, vector<8x8xf32>
    %cst_20 = arith.constant dense<0.000000e+00> : vector<8xf32>
    %51 = vector.multi_reduction <add>, %50, %cst_20 [1] : vector<8x8xf32> to vector<8xf32>
    %52 = vector.shape_cast %51 : vector<8xf32> to vector<8x1xf32>
    %53 = arith.truncf %35 : vector<8x32xf32> to vector<8x32xbf16>
    %cst_21 = arith.constant dense<0.000000e+00> : vector<8x32xf32>
    %54 = tpu.matmul %43, %53, %cst_21 {dimension_numbers = #tpu.dot_dimension_numbers<[1], [0], [0], [1], [0, 0, 1, 1], [], []>} : vector<8x8xbf16>, vector<8x32xbf16>, vector<8x32xf32> -> vector<8x32xf32>
    %55 = arith.truncf %37 : vector<8x32xf32> to vector<8x32xbf16>
    %cst_22 = arith.constant dense<0.000000e+00> : vector<8x32xf32>
    %56 = tpu.matmul %47, %55, %cst_22 {dimension_numbers = #tpu.dot_dimension_numbers<[1], [0], [0], [1], [0, 0, 1, 1], [], []>} : vector<8x8xbf16>, vector<8x32xbf16>, vector<8x32xf32> -> vector<8x32xf32>
    %57 = arith.addf %54, %56 : vector<8x32xf32>
    %58 = vector.broadcast %52 : vector<8x1xf32> to vector<8x32xf32>
    %59 = arith.mulf %58, %36 : vector<8x32xf32>
    %60 = arith.addf %57, %59 : vector<8x32xf32>
    %cst_23 = arith.constant dense<0.000000e+00> : vector<8xf32>
    %61 = vector.multi_reduction <add>, %60, %cst_23 [1] : vector<8x32xf32> to vector<8xf32>
    %62 = vector.shape_cast %61 : vector<8xf32> to vector<8x1xf32>
    %cst_24 = arith.constant 3.200000e+01 : f32
    %63 = vector.broadcast %cst_24 : f32 to vector<8x1xf32>
    %64 = arith.divf %62, %63 : vector<8x1xf32>
    %65 = vector.broadcast %64 : vector<8x1xf32> to vector<8x32xf32>
    %66 = arith.subf %60, %65 : vector<8x32xf32>
    %67 = arith.mulf %66, %66 : vector<8x32xf32>
    %cst_25 = arith.constant dense<0.000000e+00> : vector<8xf32>
    %68 = vector.multi_reduction <add>, %67, %cst_25 [1] : vector<8x32xf32> to vector<8xf32>
    %69 = vector.shape_cast %68 : vector<8xf32> to vector<8x1xf32>
    %cst_26 = arith.constant 3.200000e+01 : f32
    %70 = vector.broadcast %cst_26 : f32 to vector<8x1xf32>
    %71 = arith.divf %69, %70 : vector<8x1xf32>
    %72 = vector.broadcast %64 : vector<8x1xf32> to vector<8x32xf32>
    %73 = arith.subf %60, %72 : vector<8x32xf32>
    %cst_27 = arith.constant 9.99999996E-13 : f32
    %74 = vector.broadcast %cst_27 : f32 to vector<8x1xf32>
    %75 = arith.addf %71, %74 : vector<8x1xf32>
    %76 = math.rsqrt %75 : vector<8x1xf32>
    %77 = vector.broadcast %76 : vector<8x1xf32> to vector<8x32xf32>
    %78 = arith.mulf %73, %77 : vector<8x32xf32>
    %c0_28 = arith.constant 0 : index
    %c0_29 = arith.constant 0 : index
    %c0_30 = arith.constant 0 : index
    %79 = vector.load %arg6[%c0_28, %c0_29, %c0_30] : memref<1x1x32xf32, #tpu.memory_space<vmem>>, vector<1x1x32xf32>
    %80 = vector.shape_cast %79 : vector<1x1x32xf32> to vector<1x32xf32>
    %81 = vector.broadcast %80 : vector<1x32xf32> to vector<8x32xf32>
    %82 = arith.mulf %78, %81 : vector<8x32xf32>
    %c0_31 = arith.constant 0 : index
    %c0_32 = arith.constant 0 : index
    %c0_33 = arith.constant 0 : index
    %83 = vector.load %arg7[%c0_31, %c0_32, %c0_33] : memref<1x1x32xf32, #tpu.memory_space<vmem>>, vector<1x1x32xf32>
    %84 = vector.shape_cast %83 : vector<1x1x32xf32> to vector<1x32xf32>
    %85 = vector.broadcast %84 : vector<1x32xf32> to vector<8x32xf32>
    %86 = arith.addf %82, %85 : vector<8x32xf32>
    %cst_34 = arith.constant 0.000000e+00 : f32
    %87 = vector.broadcast %cst_34 : f32 to vector<8x32xf32>
    %88 = arith.maximumf %86, %87 : vector<8x32xf32>
    %c0_35 = arith.constant 0 : index
    %c0_36 = arith.constant 0 : index
    %89 = vector.load %arg9[%c0_35, %c0_36] : memref<8x32xf32, #tpu.memory_space<vmem>>, vector<8x32xf32>
    tpu.vector_store %arg9[%c0_35, %c0_36], %88 {strides = array<i32>} : memref<8x32xf32, #tpu.memory_space<vmem>>, vector<8x32xf32>,
    %c1_i32 = arith.constant 1 : i32
    %90 = arith.cmpi eq, %arg1, %c1_i32 : i32
    %91 = arith.extui %90 : i1 to i32
    %c0_i32_37 = arith.constant 0 : i32
    %92 = arith.cmpi ne, %91, %c0_i32_37 : i32
    scf.if %92 {
      %c0_38 = arith.constant 0 : index
      %c0_39 = arith.constant 0 : index
      %c0_40 = arith.constant 0 : index
      %93 = vector.load %arg8[%c0_38, %c0_39, %c0_40] : memref<1x8x32xf32, #tpu.memory_space<vmem>>, vector<1x8x32xf32>
      %94 = vector.shape_cast %93 : vector<1x8x32xf32> to vector<8x32xf32>
      %95 = vector.shape_cast %88 : vector<8x32xf32> to vector<1x8x32xf32>
      tpu.vector_store %arg8[%c0_38, %c0_39, %c0_40], %95 {strides = array<i32>} : memref<1x8x32xf32, #tpu.memory_space<vmem>>, vector<1x8x32xf32>,
    } else {
    }
    return
  }
  func.func @transform_0(%arg0: i32, %arg1: i32) -> (i32, i32, i32) {
    %c0_i32 = arith.constant 0 : i32
    %c0_i32_0 = arith.constant 0 : i32
    %c0_i32_1 = arith.constant 0 : i32
    return %arg0, %c0_i32, %c0_i32_0 : i32, i32, i32
  }
  func.func @transform_1(%arg0: i32, %arg1: i32) -> (i32, i32, i32) {
    %c0_i32 = arith.constant 0 : i32
    %c0_i32_0 = arith.constant 0 : i32
    %c0_i32_1 = arith.constant 0 : i32
    return %arg0, %c0_i32, %c0_i32_0 : i32, i32, i32
  }
  func.func @transform_2(%arg0: i32, %arg1: i32) -> (i32, i32, i32) {
    %c0_i32 = arith.constant 0 : i32
    %c0_i32_0 = arith.constant 0 : i32
    %c0_i32_1 = arith.constant 0 : i32
    return %arg1, %c0_i32, %c0_i32_0 : i32, i32, i32
  }
  func.func @transform_3(%arg0: i32, %arg1: i32) -> (i32, i32, i32) {
    %c0_i32 = arith.constant 0 : i32
    %c0_i32_0 = arith.constant 0 : i32
    %c0_i32_1 = arith.constant 0 : i32
    return %arg1, %c0_i32, %c0_i32_0 : i32, i32, i32
  }
  func.func @transform_4(%arg0: i32, %arg1: i32) -> (i32, i32, i32) {
    %c0_i32 = arith.constant 0 : i32
    %c0_i32_0 = arith.constant 0 : i32
    %c0_i32_1 = arith.constant 0 : i32
    return %arg1, %c0_i32, %c0_i32_0 : i32, i32, i32
  }
  func.func @transform_5(%arg0: i32, %arg1: i32) -> (i32, i32, i32) {
    %c0_i32 = arith.constant 0 : i32
    %c0_i32_0 = arith.constant 0 : i32
    %c0_i32_1 = arith.constant 0 : i32
    return %arg1, %c0_i32, %c0_i32_0 : i32, i32, i32
  }
  func.func @transform_6(%arg0: i32, %arg1: i32) -> (i32, i32, i32) {
    %c0_i32 = arith.constant 0 : i32
    %c0_i32_0 = arith.constant 0 : i32
    %c0_i32_1 = arith.constant 0 : i32
    return %arg0, %c0_i32, %c0_i32_0 : i32, i32, i32
  }
}

</mosaic_0001>

<llo_original>
// kernel: tpu_custom_call.1
$region0: #{tpu_custom_call.1}
  #allocation0 [shape = 'u32[]', space=smem, size = 0x4, offset = 0x4, fixed_abs, tag = 'smem constant byte address 0x4 - core index']
  #allocation1 [shape = 'u32[144,128]{1,0:T(1,128)}', space=vmem, size = 0x12000, scoped, tag = 'internal scratch']
  #allocation2 [shape = 'f32[8,32]{1,0:T(8,128)}', space=vmem, size = 0x1000, scoped, tag = 'scratch operand']
  %s0 = inlined_call_operand.hbm [shape: f32[2,8,32], index: 0, kind: input, shape index: {}]
  %s1 = inlined_call_operand.hbm [shape: f32[2,8,8], index: 1, kind: input, shape index: {}]
  %s2 = inlined_call_operand.hbm [shape: bf16[2,32,96], index: 2, kind: input, shape index: {}]
  %s3 = inlined_call_operand.vmem [shape: f32[2,1,96], index: 3, kind: input, shape index: {}]
  %s4 = inlined_call_operand.vmem [shape: f32[2,1,32], index: 4, kind: input, shape index: {}]
  %s5 = inlined_call_operand.vmem [shape: f32[2,1,32], index: 5, kind: input, shape index: {}]
  %s6 = inlined_call_operand.hbm [shape: f32[2,8,32], index: 6, kind: output, shape index: {}]
  %s7 = sld [smem:[#allocation0]]
  $region77: #{tpu_custom_call.1} parent=0
    _
  %s9 = ssub.s32 1, %s7
  %s10 = scalar_select 0, %s9, %s7
  $region1: #{tpu_custom_call.1} parent=0
    #allocation3 [shape = 'u8[8192]{0}', space=vmem, size = 0x2000, scoped, tag = 'input window, operand 0']
    #allocation4 [shape = 's32[2]{0}', space=sflag, size = 0x8, scoped, tag = 'scoped memory for tpu_custom_call.1']
    #allocation5 [shape = 's32[2]{0}', space=sflag, size = 0x8, scoped, tag = 'scoped memory for tpu_custom_call.1']
    #allocation6 [shape = 'u8[8192]{0}', space=vmem, size = 0x2000, scoped, tag = 'input window, operand 1']
    #allocation7 [shape = 's32[2]{0}', space=sflag, size = 0x8, scoped, tag = 'scoped memory for tpu_custom_call.1']
    #allocation8 [shape = 'u8[16384]{0}', space=vmem, size = 0x4000, scoped, tag = 'input window, operand 2']
    #allocation9 [shape = 'u8[8192]{0}', space=vmem, size = 0x2000, scoped, tag = 'output window, operand 0']
    %11 = vsyncpa [#allocation4], 0
    %s12 = scalar_lea.sflag [#allocation4], 1
    %13 = vsyncpa %s12, 0
    %14 = vsyncpa [#allocation7], 0
    %s15 = scalar_lea.sflag [#allocation7], 1
    %16 = vsyncpa %s15, 0
    %17 = vsyncpa [#allocation5], 0
    %s18 = scalar_lea.sflag [#allocation5], 1
    %19 = vsyncpa %s18, 0
    loop: start=0, step=1, limit=6
    $region2: #{tpu_custom_call.1} parent=1 // loop_pre_header
      _
    $region3: #{tpu_custom_call.1} parent=1 // loop_header
      %s21 = sphi 0, %s25
      %p22 = scmp.ge.s32.totalorder %s21, 6
      %s28 = sphi 0, %s40
      %s29 = sphi 0, %s36
      %s30 = sphi 0, %s28
      %s31 = sphi 0, %s29
      %s32 = sphi 0, %s30
      %s33 = sphi 0, %s31
      %s43 = sphi 0, %s45
      %s46 = sphi 0, %s43
      %s47 = sphi 0, %s46
      %s63 = sphi 0, %s47
      %s69 = sphi 0, %s71
      %s72 = sphi 0, %s69
      %s73 = sphi 0, %s72
      %s89 = sphi 0, %s73
      %s95 = sphi 0, %s97
      %s98 = sphi 0, %s95
      %s99 = sphi 0, %s98
      %s115 = sphi 0, %s99
      %s121 = sphi 0, %s123
      %s124 = sphi 0, %s121
      %s125 = sphi 0, %s124
      %s141 = sphi 0, %s125
      %s147 = sphi 0, %s149
      %s150 = sphi 0, %s147
      %s151 = sphi 0, %s150
      %s167 = sphi 0, %s151
      %s173 = sphi 0, %s175
      %s176 = sphi 0, %s173
      %s177 = sphi 0, %s176
      %s193 = sphi 0, %s177
      %s199 = sphi 0, %s201
      %s202 = sphi 0, %s199
      %s203 = sphi 0, %s202
      %s219 = sphi 0, %s203
    $region4: #{tpu_custom_call.1} parent=1 // loop_header_branch
      %24 = sbr.rel (%p22) target = $region8
    $region5: #{tpu_custom_call.1} parent=1 // loop_body
      %s26 = ssub.s32 %s21, 1
      %s27 = ssub.s32 %s21, 2
      %s34 = sadd.s32 1, %s29
      %p35 = scmp.ge.s32.totalorder %s34, 2
      %s36 = scalar_select %p35, 0, %s34
      %s37 = sadd.s32 1, %s28
      %s38 = scalar_select %p35, %s37, %s28
      %p39 = scmp.ge.s32.totalorder %s38, 2
      %s40 = scalar_select %p39, 0, %s38
      %s41 = ssub.s32 %s28, %s40
      %p42 = scmp.eq.s32.totalorder %s41, 0
      %s44 = sadd.s32 %s43, 1
      %s45 = scalar_select %p42, %s43, %s44
      %p48 = pneg %p42
      %p49 = scmp.eq.s32.totalorder %s21, 3
      %p50 = por %p48, %p49
      %p51 = scmp.ne.s32.totalorder %s43, %s46
      %p52 = scmp.eq.s32.totalorder %s21, 0
      %p53 = por %p51, %p52
      %p54 = scmp.ne.s32.totalorder %s43, %s46
      %p55 = scmp.eq.s32.totalorder %s26, 3
      %p56 = por %p54, %p55
      %p57 = scmp.ne.s32.totalorder %s46, %s47
      %p58 = scmp.eq.s32.totalorder %s26, 0
      %p59 = por %p57, %p58
      %p60 = scmp.ne.s32.totalorder %s46, %s47
      %p61 = scmp.eq.s32.totalorder %s27, 3
      %p62 = por %p60, %p61
      %p64 = scmp.ne.s32.totalorder %s47, %s63
      %p65 = scmp.eq.s32.totalorder %s27, 0
      %p66 = por %p64, %p65
      %s67 = ssub.s32 %s28, %s40
      %p68 = scmp.eq.s32.totalorder %s67, 0
      %s70 = sadd.s32 %s69, 1
      %s71 = scalar_select %p68, %s69, %s70
      %p74 = pneg %p68
      %p75 = scmp.eq.s32.totalorder %s21, 3
      %p76 = por %p74, %p75
      %p77 = scmp.ne.s32.totalorder %s69, %s72
      %p78 = scmp.eq.s32.totalorder %s21, 0
      %p79 = por %p77, %p78
      %p80 = scmp.ne.s32.totalorder %s69, %s72
      %p81 = scmp.eq.s32.totalorder %s26, 3
      %p82 = por %p80, %p81
      %p83 = scmp.ne.s32.totalorder %s72, %s73
      %p84 = scmp.eq.s32.totalorder %s26, 0
      %p85 = por %p83, %p84
      %p86 = scmp.ne.s32.totalorder %s72, %s73
      %p87 = scmp.eq.s32.totalorder %s27, 3
      %p88 = por %p86, %p87
      %p90 = scmp.ne.s32.totalorder %s73, %s89
      %p91 = scmp.eq.s32.totalorder %s27, 0
      %p92 = por %p90, %p91
      %s93 = ssub.s32 %s29, %s36
      %p94 = scmp.eq.s32.totalorder %s93, 0
      %s96 = sadd.s32 %s95, 1
      %s97 = scalar_select %p94, %s95, %s96
      %p100 = pneg %p94
      %p101 = scmp.eq.s32.totalorder %s21, 3
      %p102 = por %p100, %p101
      %p103 = scmp.ne.s32.totalorder %s95, %s98
      %p104 = scmp.eq.s32.totalorder %s21, 0
      %p105 = por %p103, %p104
      %p106 = scmp.ne.s32.totalorder %s95, %s98
      %p107 = scmp.eq.s32.totalorder %s26, 3
      %p108 = por %p106, %p107
      %p109 = scmp.ne.s32.totalorder %s98, %s99
      %p110 = scmp.eq.s32.totalorder %s26, 0
      %p111 = por %p109, %p110
      %p112 = scmp.ne.s32.totalorder %s98, %s99
      %p113 = scmp.eq.s32.totalorder %s27, 3
      %p114 = por %p112, %p113
      %p116 = scmp.ne.s32.totalorder %s99, %s115
      %p117 = scmp.eq.s32.totalorder %s27, 0
      %p118 = por %p116, %p117
      %s119 = ssub.s32 %s29, %s36
      %p120 = scmp.eq.s32.totalorder %s119, 0
      %s122 = sadd.s32 %s121, 1
      %s123 = scalar_select %p120, %s121, %s122
      %p126 = pneg %p120
      %p127 = scmp.eq.s32.totalorder %s21, 3
      %p128 = por %p126, %p127
      %p129 = scmp.ne.s32.totalorder %s121, %s124
      %p130 = scmp.eq.s32.totalorder %s21, 0
      %p131 = por %p129, %p130
      %p132 = scmp.ne.s32.totalorder %s121, %s124
      %p133 = scmp.eq.s32.totalorder %s26, 3
      %p134 = por %p132, %p133
      %p135 = scmp.ne.s32.totalorder %s124, %s125
      %p136 = scmp.eq.s32.totalorder %s26, 0
      %p137 = por %p135, %p136
      %p138 = scmp.ne.s32.totalorder %s124, %s125
      %p139 = scmp.eq.s32.totalorder %s27, 3
      %p140 = por %p138, %p139
      %p142 = scmp.ne.s32.totalorder %s125, %s141
      %p143 = scmp.eq.s32.totalorder %s27, 0
      %p144 = por %p142, %p143
      %s145 = ssub.s32 %s29, %s36
      %p146 = scmp.eq.s32.totalorder %s145, 0
      %s148 = sadd.s32 %s147, 1
      %s149 = scalar_select %p146, %s147, %s148
      %p152 = pneg %p146
      %p153 = scmp.eq.s32.totalorder %s21, 3
      %p154 = por %p152, %p153
      %p155 = scmp.ne.s32.totalorder %s147, %s150
      %p156 = scmp.eq.s32.totalorder %s21, 0
      %p157 = por %p155, %p156
      %p158 = scmp.ne.s32.totalorder %s147, %s150
      %p159 = scmp.eq.s32.totalorder %s26, 3
      %p160 = por %p158, %p159
      %p161 = scmp.ne.s32.totalorder %s150, %s151
      %p162 = scmp.eq.s32.totalorder %s26, 0
      %p163 = por %p161, %p162
      %p164 = scmp.ne.s32.totalorder %s150, %s151
      %p165 = scmp.eq.s32.totalorder %s27, 3
      %p166 = por %p164, %p165
      %p168 = scmp.ne.s32.totalorder %s151, %s167
      %p169 = scmp.eq.s32.totalorder %s27, 0
      %p170 = por %p168, %p169
      %s171 = ssub.s32 %s29, %s36
      %p172 = scmp.eq.s32.totalorder %s171, 0
      %s174 = sadd.s32 %s173, 1
      %s175 = scalar_select %p172, %s173, %s174
      %p178 = pneg %p172
      %p179 = scmp.eq.s32.totalorder %s21, 3
      %p180 = por %p178, %p179
      %p181 = scmp.ne.s32.totalorder %s173, %s176
      %p182 = scmp.eq.s32.totalorder %s21, 0
      %p183 = por %p181, %p182
      %p184 = scmp.ne.s32.totalorder %s173, %s176
      %p185 = scmp.eq.s32.totalorder %s26, 3
      %p186 = por %p184, %p185
      %p187 = scmp.ne.s32.totalorder %s176, %s177
      %p188 = scmp.eq.s32.totalorder %s26, 0
      %p189 = por %p187, %p188
      %p190 = scmp.ne.s32.totalorder %s176, %s177
      %p191 = scmp.eq.s32.totalorder %s27, 3
      %p192 = por %p190, %p191
      %p194 = scmp.ne.s32.totalorder %s177, %s193
      %p195 = scmp.eq.s32.totalorder %s27, 0
      %p196 = por %p194, %p195
      %s197 = ssub.s32 %s28, %s40
      %p198 = scmp.eq.s32.totalorder %s197, 0
      %s200 = sadd.s32 %s199, 1
      %s201 = scalar_select %p198, %s199, %s200
      %p204 = pneg %p198
      %p205 = scmp.eq.s32.totalorder %s21, 3
      %p206 = por %p204, %p205
      %p207 = scmp.ne.s32.totalorder %s199, %s202
      %p208 = scmp.eq.s32.totalorder %s21, 0
      %p209 = por %p207, %p208
      %p210 = scmp.ne.s32.totalorder %s199, %s202
      %p211 = scmp.eq.s32.totalorder %s26, 3
      %p212 = por %p210, %p211
      %p213 = scmp.ne.s32.totalorder %s202, %s203
      %p214 = scmp.eq.s32.totalorder %s26, 0
      %p215 = por %p213, %p214
      %p216 = scmp.ne.s32.totalorder %s202, %s203
      %p217 = scmp.eq.s32.totalorder %s27, 3
      %p218 = por %p216, %p217
      %p220 = scmp.ne.s32.totalorder %s203, %s219
      %p221 = scmp.eq.s32.totalorder %s27, 0
      %p222 = por %p220, %p221
      %p223 = scmp.le.s32.totalorder 1, %s21
      %p224 = scmp.lt.s32.totalorder %s21, 5
      %p225 = pnand %p223, %p224
      %p226 = pneg %p225
      // Predicated region
      $region9: #{tpu_custom_call.1} parent=5 // pred_check
        _
      $region10: #{tpu_custom_call.1} parent=5 // pred_check_branch
        %228 = sbr.rel (%p225) target = $region12
      $region11: #{tpu_custom_call.1} parent=5 // pred_region
        %s229 = ssub.s32 %s21, 1
      $region12: #{tpu_custom_call.1} parent=5 // pred_fallthru
        _
      %p230 = scmp.lt.s32.totalorder %s21, 4
      // Predicated region
      $region13: #{tpu_custom_call.1} parent=5 // pred_check
        %p231 = pneg %p230
      $region14: #{tpu_custom_call.1} parent=5 // pred_check_branch
        %233 = sbr.rel (%p231) target = $region16
      $region15: #{tpu_custom_call.1} parent=5 // pred_region
        // Predicated region
        $region17: #{tpu_custom_call.1} parent=15 // pred_check
          %p234 = pneg %p53
        $region18: #{tpu_custom_call.1} parent=15 // pred_check_branch
          %236 = sbr.rel (%p234) target = $region20
        $region19: #{tpu_custom_call.1} parent=15 // pred_region
          %s237 = sand.u32 %s43, 1
          %s238 = scalar_lea.sflag [#allocation4], %s237
          %s239 = sand.u32 %s43, 1
          %s240 = smul.addr %s239, 8
          %s241 = scalar_lea.vmem [#allocation3], %s240
          %s243 = ssub.s32 128, 128
          %244 = vsyncadd %s238, %s243
          %s245 = smul.addr %s28, 128
          %s246 = scalar_lea.hbm %s0, %s245
          %s248 = sshll.u32 %s241, 4
          %s249 = int_to_ptr.vmem [resolvable:$true] %s248
          %251 = dma.hbm_to_vmem [thread:$0]  %s246, 128, %s249, %s238
        $region20: #{tpu_custom_call.1} parent=15 // pred_fallthru
          _
        // Predicated region
        $region21: #{tpu_custom_call.1} parent=15 // pred_check
          %p252 = pneg %p79
        $region22: #{tpu_custom_call.1} parent=15 // pred_check_branch
          %254 = sbr.rel (%p252) target = $region24
        $region23: #{tpu_custom_call.1} parent=15 // pred_region
          %s255 = sand.u32 %s21, 1
          %s256 = scalar_lea.sflag [#allocation7], %s255
          %s257 = sand.u32 %s69, 1
          %s258 = smul.addr %s257, 8
          %s259 = scalar_lea.vmem [#allocation6], %s258
          %s261 = ssub.s32 128, 128
          %262 = vsyncadd %s256, %s261
          %s263 = smul.addr %s28, 128
          %s264 = scalar_lea.hbm %s1, %s263
          %s266 = sshll.u32 %s259, 4
          %s267 = int_to_ptr.vmem [resolvable:$true] %s266
          %269 = dma.hbm_to_vmem [thread:$0]  %s264, 128, %s267, %s256
        $region24: #{tpu_custom_call.1} parent=15 // pred_fallthru
          _
        // Predicated region
        $region25: #{tpu_custom_call.1} parent=15 // pred_check
          %p270 = pneg %p105
        $region26: #{tpu_custom_call.1} parent=15 // pred_check_branch
          %272 = sbr.rel (%p270) target = $region28
        $region27: #{tpu_custom_call.1} parent=15 // pred_region
          %s273 = sand.u32 %s21, 1
          %s274 = scalar_lea.sflag [#allocation7], %s273
          %s275 = sand.u32 %s95, 1
          %s276 = smul.addr %s275, 16
          %s277 = scalar_lea.vmem [#allocation8], %s276
          %s279 = ssub.s32 256, 256
          %280 = vsyncadd %s274, %s279
          %s281 = smul.addr %s29, 4
          %s282 = smul.addr %s281, 64
          %s283 = scalar_lea.hbm %s2, %s282
          %s284 = sshll.u32 %s277, 4
          %s285 = int_to_ptr.vmem [resolvable:$true] %s284
          %290 = dma.hbm_to_vmem [thread:$0]  %s283, 256, %s285, %s274, 64, 64, 4
        $region28: #{tpu_custom_call.1} parent=15 // pred_fallthru
          _
        // Predicated region
        $region29: #{tpu_custom_call.1} parent=15 // pred_check
          %p291 = pneg %p131
        $region30: #{tpu_custom_call.1} parent=15 // pred_check_branch
          %293 = sbr.rel (%p291) target = $region32
        $region31: #{tpu_custom_call.1} parent=15 // pred_region
          %p294 = scmp.lt.s32.totalorder %s29, 1
          %s295 = scalar_select %p294, %s29, 1
          %s296 = scalar_lea.vmem %s3, %s295
        $region32: #{tpu_custom_call.1} parent=15 // pred_fallthru
          _
        // Predicated region
        $region33: #{tpu_custom_call.1} parent=15 // pred_check
          %p297 = pneg %p157
        $region34: #{tpu_custom_call.1} parent=15 // pred_check_branch
          %299 = sbr.rel (%p297) target = $region36
        $region35: #{tpu_custom_call.1} parent=15 // pred_region
          %p300 = scmp.lt.s32.totalorder %s29, 1
          %s301 = scalar_select %p300, %s29, 1
          %s302 = scalar_lea.vmem %s4, %s301
        $region36: #{tpu_custom_call.1} parent=15 // pred_fallthru
          _
        // Predicated region
        $region37: #{tpu_custom_call.1} parent=15 // pred_check
          %p303 = pneg %p183
        $region38: #{tpu_custom_call.1} parent=15 // pred_check_branch
          %305 = sbr.rel (%p303) target = $region40
        $region39: #{tpu_custom_call.1} parent=15 // pred_region
          %p306 = scmp.lt.s32.totalorder %s29, 1
          %s307 = scalar_select %p306, %s29, 1
          %s308 = scalar_lea.vmem %s5, %s307
        $region40: #{tpu_custom_call.1} parent=15 // pred_fallthru
          _
      $region16: #{tpu_custom_call.1} parent=5 // pred_fallthru
        _
      %p309 = scmp.le.s32.totalorder 1, %s21
      %p310 = scmp.lt.s32.totalorder %s21, 5
      %p311 = pnand %p309, %p310
      %p312 = pneg %p311
      // Predicated region
      $region41: #{tpu_custom_call.1} parent=5 // pred_check
        _
      $region42: #{tpu_custom_call.1} parent=5 // pred_check_branch
        %314 = sbr.rel (%p311) target = $region44
      $region43: #{tpu_custom_call.1} parent=5 // pred_region
        %s315 = ssub.s32 %s21, 1
        %s316 = sand.u32 %s46, 1
        %s317 = scalar_lea.sflag [#allocation4], %s316
        %s318 = sand.u32 %s46, 1
        %s319 = smul.addr %s318, 8
        %s320 = scalar_lea.vmem [#allocation3], %s319
        // Predicated region
        $region45: #{tpu_custom_call.1} parent=43 // pred_check
          %p321 = pneg %p59
        $region46: #{tpu_custom_call.1} parent=43 // pred_check_branch
          %323 = sbr.rel (%p321) target = $region48
        $region47: #{tpu_custom_call.1} parent=43 // pred_region
          %324 = dma.done %s317, 128
        $region48: #{tpu_custom_call.1} parent=43 // pred_fallthru
          _
        %s325 = sand.u32 %s26, 1
        %s326 = scalar_lea.sflag [#allocation7], %s325
        %s327 = sand.u32 %s72, 1
        %s328 = smul.addr %s327, 8
        %s329 = scalar_lea.vmem [#allocation6], %s328
        // Predicated region
        $region49: #{tpu_custom_call.1} parent=43 // pred_check
          %p330 = pneg %p85
        $region50: #{tpu_custom_call.1} parent=43 // pred_check_branch
          %332 = sbr.rel (%p330) target = $region52
        $region51: #{tpu_custom_call.1} parent=43 // pred_region
          %333 = dma.done %s326, 128
        $region52: #{tpu_custom_call.1} parent=43 // pred_fallthru
          _
        %s334 = sand.u32 %s26, 1
        %s335 = scalar_lea.sflag [#allocation7], %s334
        %s336 = sand.u32 %s98, 1
        %s337 = smul.addr %s336, 16
        %s338 = scalar_lea.vmem [#allocation8], %s337
        // Predicated region
        $region53: #{tpu_custom_call.1} parent=43 // pred_check
          %p339 = pneg %p111
        $region54: #{tpu_custom_call.1} parent=43 // pred_check_branch
          %341 = sbr.rel (%p339) target = $region56
        $region55: #{tpu_custom_call.1} parent=43 // pred_region
          %342 = dma.done %s335, 256
        $region56: #{tpu_custom_call.1} parent=43 // pred_fallthru
          _
        %s343 = sand.u32 %s46, 1
        %s344 = scalar_lea.sflag [#allocation4], %s343
        %s345 = sand.u32 %s46, 1
        %s346 = smul.addr %s345, 8
        %s347 = scalar_lea.vmem [#allocation3], %s346
        %p348 = pneg %p59
        %p349 = pneg %p56
        %s350 = sand.u32 %s26, 1
        %s351 = scalar_lea.sflag [#allocation7], %s350
        %s352 = sand.u32 %s72, 1
        %s353 = smul.addr %s352, 8
        %s354 = scalar_lea.vmem [#allocation6], %s353
        %p355 = pneg %p85
        %p356 = pneg %p82
        %s357 = sand.u32 %s26, 1
        %s358 = scalar_lea.sflag [#allocation7], %s357
        %s359 = sand.u32 %s98, 1
        %s360 = smul.addr %s359, 16
        %s361 = scalar_lea.vmem [#allocation8], %s360
        %p362 = pneg %p111
        %p363 = pneg %p108
        %p364 = scmp.lt.s32.totalorder %s31, 1
        %s365 = scalar_select %p364, %s31, 1
        %s366 = scalar_lea.vmem %s3, %s365
        %p367 = pneg %p137
        %p368 = pneg %p134
        %p369 = scmp.lt.s32.totalorder %s31, 1
        %s370 = scalar_select %p369, %s31, 1
        %s371 = scalar_lea.vmem %s4, %s370
        %p372 = pneg %p163
        %p373 = pneg %p160
        %p374 = scmp.lt.s32.totalorder %s31, 1
        %s375 = scalar_select %p374, %s31, 1
        %s376 = scalar_lea.vmem %s5, %s375
        %p377 = pneg %p189
        %p378 = pneg %p186
        %p379 = pneg %p215
        %p380 = pneg %p212
        %s381 = sand.u32 %s202, 1
        %s382 = scalar_lea.sflag [#allocation5], %s381
        %s383 = sand.u32 %s202, 1
        %s384 = smul.addr %s383, 8
        %s385 = scalar_lea.vmem [#allocation9], %s384
        %p386 = scmp.lt.s32.totalorder %s31, 1
        %s387 = scalar_select %p386, %s31, 1
        %s388 = scalar_lea.vmem %s3, %s387
        %p389 = scmp.lt.s32.totalorder %s31, 1
        %s390 = scalar_select %p389, %s31, 1
        %s391 = scalar_lea.vmem %s4, %s390
        %p392 = scmp.lt.s32.totalorder %s31, 1
        %s393 = scalar_select %p392, %s31, 1
        %s394 = scalar_lea.vmem %s5, %s393
        %p396 = scmp.eq.s32.totalorder %s31, 0
        // Predicated region
        $region57: #{tpu_custom_call.1} parent=43 // pred_check
          %p397 = pneg %p396
        $region58: #{tpu_custom_call.1} parent=43 // pred_check_branch
          %399 = sbr.rel (%p397) target = $region60
        $region59: #{tpu_custom_call.1} parent=43 // pred_region
          %v400 = vld [vmem:[%s320] sm:$0xff]
          %vm401 = vcmask 261120
          %402 = vst.msk [vmem:[#allocation2] sm:$0xff] %vm401, %v400
        $region60: #{tpu_custom_call.1} parent=43 // pred_fallthru
          _
        %v403 = vld [vmem:[#allocation2] sm:$0xff]
        %v404 = vld [vmem:[%s329] sm:$0xff]
        %v405 = vpack.c.bf16 %v403, %v403
        %vm406 = vcmask 261120
        %v408 = vsel %vm406, %v405, 0
        %410 = vmatprep.subr.bf16.mxu0 0
        %411 = vmatpush1.bf16.xpose.msra.mxu0 %v408
        %412 = vmatprep.subr.bf16.mxu0 0
        %413 = vmatpush1.bf16.xpose.msra.mxu0 0
        %414 = vmatprep.subr.bf16.mxu0 0
        %415 = vmatpush1.bf16.xpose.msra.mxu0 0
        %416 = vmatprep.subr.bf16.mxu0 0
        %417 = vmatpush1.bf16.xpose.msra.mxu0 0
        %418 = vmatprep.subr.bf16.mxu0 0
        %419 = vmatpush1.bf16.xpose.msra.mxu0 0
        %420 = vmatprep.subr.bf16.mxu0 0
        %421 = vmatpush1.bf16.xpose.msra.mxu0 0
        %422 = vmatprep.subr.bf16.mxu0 0
        %423 = vmatpush1.bf16.xpose.msra.mxu0 0
        %424 = vmatprep.subr.bf16.mxu0 0
        %425 = vmatpush1.bf16.xpose.msra.mxu0 0
        %426 = vmatprep.subr.bf16.mxu0 0
        %427 = vmatpush1.bf16.xpose.msra.mxu0 0
        %428 = vmatprep.subr.bf16.mxu0 0
        %429 = vmatpush1.bf16.xpose.msra.mxu0 0
        %430 = vmatprep.subr.bf16.mxu0 0
        %431 = vmatpush1.bf16.xpose.msra.mxu0 0
        %432 = vmatprep.subr.bf16.mxu0 0
        %433 = vmatpush1.bf16.xpose.msra.mxu0 0
        %434 = vmatprep.subr.bf16.mxu0 0
        %435 = vmatpush1.bf16.xpose.msra.mxu0 0
        %436 = vmatprep.subr.bf16.mxu0 0
        %437 = vmatpush1.bf16.xpose.msra.mxu0 0
        %438 = vmatprep.subr.bf16.mxu0 0
        %439 = vmatpush1.bf16.xpose.msra.mxu0 0
        %440 = vmatprep.subr.bf16.mxu0 0
        %441 = vmatpush1.bf16.xpose.msra.mxu0 0
        %442 = vmatprep.mubr.bf16.mxu0 0
        %443 = vmatmul.mubr.bf16.gmra.mrb[0].mxu0 %v408
        %v444 = vpop.f32.mrb[0].mxu0
        %v445 = vadd.f32 0.0, %v444
        %v446 = vpop.f32.mrb[0].mxu0
        %v447 = vpop.f32.mrb[0].mxu0
        %v448 = vpop.f32.mrb[0].mxu0
        %449 = vdwg.mxu0
        %v450 = vmul.f32 %v445, 0.17677669
        %vm451 = vcmask 64512
        %v452 = vsel %vm451, %v450, -inf
        %453 = vmax.xlane.f32.xlu0 %v452
        %v454 = vpop.xlane.xlu0 %453
        %v455 = vsub.f32 %v450, %v454
        %v456 = vmul.f32 %v455, 1.442695
        %v457 = vpow.pop %v456
        %v458 = vsel %vm451, %v457, 0.0
        %459 = vadd.xlane.f32.xlu0 %v458
        %v460 = vpop.xlane.xlu0 %459
        %v461 = vrcp.pop %v460
        %v462 = vmul.f32 %v457, %v461
        %v463 = vmul.f32 %v462, %v404
        %v464 = vsel %vm451, %v463, 0.0
        %465 = vadd.xlane.f32.xlu0 %v464
        %v466 = vpop.xlane.xlu0 %465
        %v467 = vadd.f32 %v466, 1e-10
        %v468 = vrcp.pop %v467
        %v469 = vmul.f32 %v463, %v468
        %v470 = vld [vmem:[%s338] sm:$0xf]
        %v471 = vld [vmem:[%s338 + $0x4] sm:$0xf]
        %v472 = vld [vmem:[%s338 + $0x8] sm:$0xf]
        %v473 = vld [vmem:[%s338 + $0xc] sm:$0xf]
        %v474 = vld [vmem:[%s388] sm:$0x1]
        %v476 = vlaneseq
        %v477 = vshrl.u32 %v476, 7
        %v478 = vsub.s32 0, %v477
        %v479 = vrot.slane %v474, %v478
        %v485 = vunpack.c.l.b16 %v470
        %v486 = vunpack.c.l.b16 %v471
        %v487 = vunpack.c.l.b16 %v472
        %v488 = vunpack.c.l.b16 %v473
        %v489 = vpack.c.b16 %v486, %v485
        %v490 = vpack.c.b16 %v488, %v487
        %493 = vmatprep.subr.bf16.mxu0 0
        %494 = vmatpush1.bf16.msra.mxu0 %v489
        %495 = vmatprep.subr.bf16.mxu0 0
        %496 = vmatpush1.bf16.msra.mxu0 %v490
        %497 = vmatprep.subr.bf16.mxu0 0
        %498 = vmatpush1.bf16.msra.mxu0 0
        %499 = vmatprep.subr.bf16.mxu0 0
        %500 = vmatpush1.bf16.msra.mxu0 0
        %501 = vmatprep.subr.bf16.mxu0 0
        %502 = vmatpush1.bf16.msra.mxu0 0
        %503 = vmatprep.subr.bf16.mxu0 0
        %504 = vmatpush1.bf16.msra.mxu0 0
        %505 = vmatprep.subr.bf16.mxu0 0
        %506 = vmatpush1.bf16.msra.mxu0 0
        %507 = vmatprep.subr.bf16.mxu0 0
        %508 = vmatpush1.bf16.msra.mxu0 0
        %509 = vmatprep.subr.bf16.mxu0 0
        %510 = vmatpush1.bf16.msra.mxu0 0
        %511 = vmatprep.subr.bf16.mxu0 0
        %512 = vmatpush1.bf16.msra.mxu0 0
        %513 = vmatprep.subr.bf16.mxu0 0
        %514 = vmatpush1.bf16.msra.mxu0 0
        %515 = vmatprep.subr.bf16.mxu0 0
        %516 = vmatpush1.bf16.msra.mxu0 0
        %517 = vmatprep.subr.bf16.mxu0 0
        %518 = vmatpush1.bf16.msra.mxu0 0
        %519 = vmatprep.subr.bf16.mxu0 0
        %520 = vmatpush1.bf16.msra.mxu0 0
        %521 = vmatprep.subr.bf16.mxu0 0
        %522 = vmatpush1.bf16.msra.mxu0 0
        %523 = vmatprep.subr.bf16.mxu0 0
        %524 = vmatpush1.bf16.msra.mxu0 0
        %525 = vmatprep.mubr.bf16.mxu0 0
        %526 = vmatmul.mubr.bf16.gmra.mrb[0].mxu0 %v408
        %v527 = vpop.f32.mrb[0].mxu0
        %v528 = vadd.f32 %v479, %v527
        %v529 = vpop.f32.mrb[0].mxu0
        %v530 = vpop.f32.mrb[0].mxu0
        %v531 = vpop.f32.mrb[0].mxu0
        %532 = vdwg.mxu0
        %v533 = vlaneseq
        %v534 = vshrl.u32 %v533, 7
        %v535 = vlaneseq
        %v536 = vand.u32 %v535, 127
        %vm537 = vcmp.gt.s32.totalorder %v536, %v534
        %v538 = vsel %vm537, %v469, 0.0
        %v539 = vpack.c.bf16 %v538, %v538
        %vm540 = vcmp.lt.s32.totalorder %v536, %v534
        %v541 = vsel %vm540, %v469, 0.0
        %v542 = vpack.c.bf16 %v541, %v541
        %vm543 = vcmp.eq.s32.totalorder %v536, %v534
        %v544 = vsel %vm543, %v469, 0.0
        %v545 = vsel %vm451, %v544, 0.0
        %546 = vadd.xlane.f32.xlu0 %v545
        %v547 = vpop.xlane.xlu0 %546
        %v548 = vpack.c.bf16 %v528, %v528
        %550 = vrot.lane.b32.xlu0 %v548, 64
        %v551 = vpop.permute.xlu0 %550
        %v553 = vsel %vm451, %v542, 0
        %vm555 = vcmask 1043456
        %v557 = vsel %vm555, %v551, 0
        %559 = vmatprep.subr.bf16.mxu0 0
        %560 = vmatpush1.bf16.msra.mxu0 %v557
        %561 = vmatprep.subr.bf16.mxu0 0
        %562 = vmatpush1.bf16.msra.mxu0 0
        %563 = vmatprep.subr.bf16.mxu0 0
        %564 = vmatpush1.bf16.msra.mxu0 0
        %565 = vmatprep.subr.bf16.mxu0 0
        %566 = vmatpush1.bf16.msra.mxu0 0
        %567 = vmatprep.subr.bf16.mxu0 0
        %568 = vmatpush1.bf16.msra.mxu0 0
        %569 = vmatprep.subr.bf16.mxu0 0
        %570 = vmatpush1.bf16.msra.mxu0 0
        %571 = vmatprep.subr.bf16.mxu0 0
        %572 = vmatpush1.bf16.msra.mxu0 0
        %573 = vmatprep.subr.bf16.mxu0 0
        %574 = vmatpush1.bf16.msra.mxu0 0
        %575 = vmatprep.subr.bf16.mxu0 0
        %576 = vmatpush1.bf16.msra.mxu0 0
        %577 = vmatprep.subr.bf16.mxu0 0
        %578 = vmatpush1.bf16.msra.mxu0 0
        %579 = vmatprep.subr.bf16.mxu0 0
        %580 = vmatpush1.bf16.msra.mxu0 0
        %581 = vmatprep.subr.bf16.mxu0 0
        %582 = vmatpush1.bf16.msra.mxu0 0
        %583 = vmatprep.subr.bf16.mxu0 0
        %584 = vmatpush1.bf16.msra.mxu0 0
        %585 = vmatprep.subr.bf16.mxu0 0
        %586 = vmatpush1.bf16.msra.mxu0 0
        %587 = vmatprep.subr.bf16.mxu0 0
        %588 = vmatpush1.bf16.msra.mxu0 0
        %589 = vmatprep.subr.bf16.mxu0 0
        %590 = vmatpush1.bf16.msra.mxu0 0
        %591 = vmatprep.mubr.bf16.mxu0 0
        %592 = vmatmul.mubr.bf16.gmra.mrb[0].mxu0 %v553
        %v593 = vpop.f32.mrb[0].mxu0
        %v594 = vadd.f32 0.0, %v593
        %v595 = vpop.f32.mrb[0].mxu0
        %v596 = vpop.f32.mrb[0].mxu0
        %v597 = vpop.f32.mrb[0].mxu0
        %598 = vdwg.mxu0
        %v600 = vsel %vm451, %v539, 0
        %v603 = vsel %vm555, %v548, 0
        %605 = vmatprep.subr.bf16.mxu0 0
        %606 = vmatpush1.bf16.msra.mxu0 %v603
        %607 = vmatprep.subr.bf16.mxu0 0
        %608 = vmatpush1.bf16.msra.mxu0 0
        %609 = vmatprep.subr.bf16.mxu0 0
        %610 = vmatpush1.bf16.msra.mxu0 0
        %611 = vmatprep.subr.bf16.mxu0 0
        %612 = vmatpush1.bf16.msra.mxu0 0
        %613 = vmatprep.subr.bf16.mxu0 0
        %614 = vmatpush1.bf16.msra.mxu0 0
        %615 = vmatprep.subr.bf16.mxu0 0
        %616 = vmatpush1.bf16.msra.mxu0 0
        %617 = vmatprep.subr.bf16.mxu0 0
        %618 = vmatpush1.bf16.msra.mxu0 0
        %619 = vmatprep.subr.bf16.mxu0 0
        %620 = vmatpush1.bf16.msra.mxu0 0
        %621 = vmatprep.subr.bf16.mxu0 0
        %622 = vmatpush1.bf16.msra.mxu0 0
        %623 = vmatprep.subr.bf16.mxu0 0
        %624 = vmatpush1.bf16.msra.mxu0 0
        %625 = vmatprep.subr.bf16.mxu0 0
        %626 = vmatpush1.bf16.msra.mxu0 0
        %627 = vmatprep.subr.bf16.mxu0 0
        %628 = vmatpush1.bf16.msra.mxu0 0
        %629 = vmatprep.subr.bf16.mxu0 0
        %630 = vmatpush1.bf16.msra.mxu0 0
        %631 = vmatprep.subr.bf16.mxu0 0
        %632 = vmatpush1.bf16.msra.mxu0 0
        %633 = vmatprep.subr.bf16.mxu0 0
        %634 = vmatpush1.bf16.msra.mxu0 0
        %635 = vmatprep.subr.bf16.mxu0 0
        %636 = vmatpush1.bf16.msra.mxu0 0
        %637 = vmatprep.mubr.bf16.mxu0 0
        %638 = vmatmul.mubr.bf16.gmra.mrb[0].mxu0 %v600
        %v639 = vpop.f32.mrb[0].mxu0
        %v640 = vadd.f32 %v594, %v639
        %v641 = vpop.f32.mrb[0].mxu0
        %v642 = vpop.f32.mrb[0].mxu0
        %v643 = vpop.f32.mrb[0].mxu0
        %644 = vdwg.mxu0
        %v645 = vmul.f32 %v547, %v528
        %647 = vrot.lane.b32.xlu0 %v645, 96
        %v648 = vpop.permute.xlu0 %647
        %v650 = vadd.f32 %v640, %v648
        %v651 = vsel %vm406, %v650, 0.0
        %652 = vadd.xlane.f32.xlu0 %v651
        %v653 = vpop.xlane.xlu0 %652
        %v654 = vrcp.pop 32.0
        %v655 = vmul.f32 %v653, %v654
        %v656 = vsub.f32 %v650, %v655
        %v657 = vmul.f32 %v656, %v656
        %v658 = vsel %vm406, %v657, 0.0
        %659 = vadd.xlane.f32.xlu0 %v658
        %v660 = vpop.xlane.xlu0 %659
        %v661 = vmul.f32 %v660, %v654
        %v662 = vadd.f32 %v661, 1e-12
        %v663 = vrsqrt.pop %v662
        %v664 = vmul.f32 %v656, %v663
        %v665 = vld [vmem:[%s391] sm:$0x1]
        %v667 = vlaneseq
        %v668 = vshrl.u32 %v667, 7
        %v669 = vsub.s32 0, %v668
        %v670 = vrot.slane %v665, %v669
        %v672 = vmul.f32 %v664, %v670
        %v673 = vld [vmem:[%s394] sm:$0x1]
        %v675 = vlaneseq
        %v676 = vshrl.u32 %v675, 7
        %v677 = vsub.s32 0, %v676
        %v678 = vrot.slane %v673, %v677
        %v680 = vadd.f32 %v672, %v678
        %v681 = vmax.f32 %v680, 0.0
        %682 = vst.msk [vmem:[#allocation2] sm:$0xff] %vm406, %v681
        %p683 = scmp.eq.s32.totalorder %s31, 1
        // Predicated region
        $region61: #{tpu_custom_call.1} parent=43 // pred_check
          %p684 = pneg %p683
        $region62: #{tpu_custom_call.1} parent=43 // pred_check_branch
          %686 = sbr.rel (%p684) target = $region64
        $region63: #{tpu_custom_call.1} parent=43 // pred_region
          %687 = vst.msk [vmem:[%s385] sm:$0xff] %vm406, %v681
        $region64: #{tpu_custom_call.1} parent=43 // pred_fallthru
          _
        %s688 = sand.u32 %s202, 1
        %s689 = scalar_lea.sflag [#allocation5], %s688
        %s690 = sand.u32 %s202, 1
        %s691 = smul.addr %s690, 8
        %s692 = scalar_lea.vmem [#allocation9], %s691
        // Predicated region
        $region65: #{tpu_custom_call.1} parent=43 // pred_check
          %p693 = pneg %p212
        $region66: #{tpu_custom_call.1} parent=43 // pred_check_branch
          %695 = sbr.rel (%p693) target = $region68
        $region67: #{tpu_custom_call.1} parent=43 // pred_region
          %s697 = ssub.s32 128, 128
          %698 = vsyncadd %s689, %s697
          %s699 = smul.addr %s30, 128
          %s700 = scalar_lea.hbm %s6, %s699
          %s702 = sshll.u32 %s692, 4
          %s703 = int_to_ptr.vmem [resolvable:$true] %s702
          %705 = dma.vmem_to_hbm [thread:$0]  %s703, 128, %s700, %s689
        $region68: #{tpu_custom_call.1} parent=43 // pred_fallthru
          _
      $region44: #{tpu_custom_call.1} parent=5 // pred_fallthru
        _
      %p706 = scmp.le.s32.totalorder 2, %s21
      // Predicated region
      $region69: #{tpu_custom_call.1} parent=5 // pred_check
        %p707 = pneg %p706
      $region70: #{tpu_custom_call.1} parent=5 // pred_check_branch
        %709 = sbr.rel (%p707) target = $region72
      $region71: #{tpu_custom_call.1} parent=5 // pred_region
        %s710 = ssub.s32 %s21, 2
        // Predicated region
        $region73: #{tpu_custom_call.1} parent=71 // pred_check
          %p711 = pneg %p218
        $region74: #{tpu_custom_call.1} parent=71 // pred_check_branch
          %713 = sbr.rel (%p711) target = $region76
        $region75: #{tpu_custom_call.1} parent=71 // pred_region
          %s714 = sand.u32 %s203, 1
          %s715 = scalar_lea.sflag [#allocation5], %s714
          %s716 = sand.u32 %s203, 1
          %s717 = smul.addr %s716, 8
          %s718 = scalar_lea.vmem [#allocation9], %s717
          %719 = dma.done %s715, 128
        $region76: #{tpu_custom_call.1} parent=71 // pred_fallthru
          _
      $region72: #{tpu_custom_call.1} parent=5 // pred_fallthru
        _
    $region6: #{tpu_custom_call.1} parent=1 // loop_footer
      %s25 = sadd.s32 1, %s21
    $region7: #{tpu_custom_call.1} parent=1 // loop_footer_branch
      %20 = sbr.rel target = $region3
    $region8: #{tpu_custom_call.1} parent=1 // loop_exit
      _
    %720 = vsyncpa [#allocation4], 1
    %s721 = scalar_lea.sflag [#allocation4], 1
    %722 = vsyncpa %s721, 1
    %723 = vsyncpa [#allocation7], 1
    %s724 = scalar_lea.sflag [#allocation7], 1
    %725 = vsyncpa %s724, 1
    %726 = vsyncpa [#allocation5], 1
    %s727 = scalar_lea.sflag [#allocation5], 1
    %728 = vsyncpa %s727, 1

</llo_original>
